<compile_context>
chip_gen: v5e
topology: v5e:2x2
jax: 0.10.0
libtpu: 0.0.40
codegen_flags: <defaults>
</compile_context>

<pallas_src>
import functools

import jax
import jax.numpy as jnp
import numpy as np
from jax.experimental import pallas as pl
from jax.experimental.pallas import tpu as pltpu


ROW_TILE = 256  # safe across v5e (16 MiB scoped default) / v6e / v7x; 512 ok on v6e/v7x


def _round_up(x, m):
    return ((x + m - 1) // m) * m


# ---------------------------------------------------------------------------
# Kernel 1: video embedding  (rows, 1024) @ (1024, dim) + bias, tiled over rows
# ---------------------------------------------------------------------------
def _embed_kernel(x_ref, w_ref, b_ref, o_ref, *, compute_dtype):
    o_ref[...] = (
        jnp.dot(
            x_ref[...].astype(compute_dtype),
            w_ref[...].astype(compute_dtype),
            preferred_element_type=jnp.float32,
        )
        + b_ref[...]
    ).astype(o_ref.dtype)


def video_embedding(x2d, w, b, *, tm, compute_dtype=jnp.float32):
    Mp, K = x2d.shape
    D = w.shape[1]
    kernel = functools.partial(_embed_kernel, compute_dtype=compute_dtype)
    return pl.pallas_call(
        kernel,
        out_shape=jax.ShapeDtypeStruct((Mp, D), jnp.float32),
        grid=(Mp // tm,),
        in_specs=[
            pl.BlockSpec((tm, K), lambda m: (m, 0)),
            pl.BlockSpec((K, D), lambda m: (0, 0)),   # weight stays resident
            pl.BlockSpec((1, D), lambda m: (0, 0)),
        ],
        out_specs=pl.BlockSpec((tm, D), lambda m: (m, 0)),
        compiler_params=pltpu.CompilerParams(
            dimension_semantics=("parallel",)
        ),
    )(x2d, w, b.reshape(1, D))


# ---------------------------------------------------------------------------
# Kernel 2 (shared body): row-wise ResMLP
#   out = x + LayerNorm(W2 @ relu(W1 @ x + b1) + b2)
# All refs are 2-D inside the kernel (depth axis squeezed away via BlockSpec).
# ---------------------------------------------------------------------------
def _resmlp_kernel(x_ref, w1_ref, b1_ref, w2_ref, b2_ref, g_ref, be_ref, o_ref,
                   *, compute_dtype):
    x = x_ref[...]                                            # (rows, dim) f32
    h = jnp.maximum(
        jnp.dot(
            x.astype(compute_dtype),
            w1_ref[...].astype(compute_dtype),
            preferred_element_type=jnp.float32,
        )
        + b1_ref[...],
        0.0,
    )
    y = (
        jnp.dot(
            h.astype(compute_dtype),
            w2_ref[...].astype(compute_dtype),
            preferred_element_type=jnp.float32,
        )
        + b2_ref[...]
    )
    # LayerNorm over last dim (PyTorch semantics: biased variance, eps=1e-5)
    mean = jnp.mean(y, axis=-1, keepdims=True)
    var = jnp.mean((y - mean) ** 2, axis=-1, keepdims=True)
    y_ln = (y - mean) * jax.lax.rsqrt(var + 1e-5) * g_ref[...] + be_ref[...]
    o_ref[...] = (x + y_ln).astype(o_ref.dtype)


def resmlp_video(ve, w1p, b1p, w2p, b2p, gp, bp, *, tm, compute_dtype=jnp.float32):
    """Apply all `depth` ResMLPs to the shared video rows `ve` (Mp, dim)."""
    Mp, dim = ve.shape
    depth, _, bnp = w1p.shape
    kernel = functools.partial(_resmlp_kernel, compute_dtype=compute_dtype)
    return pl.pallas_call(
        kernel,
        out_shape=jax.ShapeDtypeStruct((depth, Mp, dim), jnp.float32),
        grid=(depth, Mp // tm),            # depth-outer, rows-inner
        in_specs=[
            # ve is passed ONCE; its index_map ignores the depth axis.
            pl.BlockSpec((tm, dim), lambda d, m: (m, 0)),
            # per-depth weights: constant across the inner m loop -> resident.
            pl.BlockSpec((None, dim, bnp), lambda d, m: (d, 0, 0)),
            pl.BlockSpec((None, 1, bnp), lambda d, m: (d, 0, 0)),
            pl.BlockSpec((None, bnp, dim), lambda d, m: (d, 0, 0)),
            pl.BlockSpec((None, 1, dim), lambda d, m: (d, 0, 0)),
            pl.BlockSpec((None, 1, dim), lambda d, m: (d, 0, 0)),
            pl.BlockSpec((None, 1, dim), lambda d, m: (d, 0, 0)),
        ],
        out_specs=pl.BlockSpec((None, tm, dim), lambda d, m: (d, m, 0)),
        compiler_params=pltpu.CompilerParams(
            dimension_semantics=("parallel", "parallel")
        ),
    )(ve, w1p, b1p, w2p, b2p, gp, bp)


def resmlp_prompt(prompt, w1p, b1p, w2p, b2p, gp, bp, *, compute_dtype=jnp.float32):
    """Apply ResMLP_i to prompt_i (depth, P, dim); batch-broadcast happens outside."""
    depth, P, dim = prompt.shape
    bnp = w1p.shape[-1]
    kernel = functools.partial(_resmlp_kernel, compute_dtype=compute_dtype)
    return pl.pallas_call(
        kernel,
        out_shape=jax.ShapeDtypeStruct((depth, P, dim), jnp.float32),
        grid=(depth,),
        in_specs=[
            pl.BlockSpec((None, P, dim), lambda d: (d, 0, 0)),
            pl.BlockSpec((None, dim, bnp), lambda d: (d, 0, 0)),
            pl.BlockSpec((None, 1, bnp), lambda d: (d, 0, 0)),
            pl.BlockSpec((None, bnp, dim), lambda d: (d, 0, 0)),
            pl.BlockSpec((None, 1, dim), lambda d: (d, 0, 0)),
            pl.BlockSpec((None, 1, dim), lambda d: (d, 0, 0)),
            pl.BlockSpec((None, 1, dim), lambda d: (d, 0, 0)),
        ],
        out_specs=pl.BlockSpec((None, P, dim), lambda d: (d, 0, 0)),
        compiler_params=pltpu.CompilerParams(
            dimension_semantics=("parallel",)
        ),
    )(prompt, w1p, b1p, w2p, b2p, gp, bp)


# ---------------------------------------------------------------------------
# One-time parameter preprocessing: pad bottleneck width bn -> multiple of 128
# (zero columns of W1/b1, zero rows of W2 -> exact zeros through ReLU, so the
#  math is unchanged) and reshape biases / LN params to (depth, 1, dim).
# ---------------------------------------------------------------------------
def prepare_padded_params(params):
    depth, dim, bn = params["w1"].shape
    bnp = max(128, _round_up(bn, 128))
    pad = bnp - bn
    return {
        "w1": jnp.pad(params["w1"], ((0, 0), (0, 0), (0, pad))),
        "b1": jnp.pad(params["b1"], ((0, 0), (0, pad))).reshape(depth, 1, bnp),
        "w2": jnp.pad(params["w2"], ((0, 0), (0, pad), (0, 0))),
        "b2": params["b2"].reshape(depth, 1, dim),
        "gamma": params["gamma"].reshape(depth, 1, dim),
        "beta": params["beta"].reshape(depth, 1, dim),
    }


# ---------------------------------------------------------------------------
# Full Prompting forward
# ---------------------------------------------------------------------------
def prompting_forward(vfeat, params, padded=None, *, depth, use_mlp=True,
                      row_tile=ROW_TILE, compute_dtype=jnp.float32):
    bsz, T, feat_in = vfeat.shape
    dim = params["W_emb"].shape[1]
    P = params["prompt"].shape[1]

    # ---- row tiling / padding for the video rows (M = bsz*T) ----
    Mv = bsz * T
    tm = Mv if Mv <= row_tile else row_tile
    Mp = _round_up(Mv, tm)
    x2d = vfeat.reshape(Mv, feat_in)
    if Mp != Mv:
        x2d = jnp.pad(x2d, ((0, Mp - Mv), (0, 0)))

    # 1) video embedding (tiled Pallas matmul, weight resident across tiles)
    ve_p = video_embedding(x2d, params["W_emb"], params["b_emb"],
                           tm=tm, compute_dtype=compute_dtype)      # (Mp, dim)

    if not use_mlp:
        ve = ve_p[:Mv].reshape(bsz, T, dim)
        outs = []
        for i in range(depth):
            p_i = jnp.broadcast_to(params["prompt"][i][None], (bsz, P, dim))
            outs.append(jnp.concatenate([p_i, ve], axis=1))
        return outs

    if padded is None:
        padded = prepare_padded_params(params)

    # 2) ResMLP on the shared video rows: ve passed once, no depth-broadcast.
    out_vid = resmlp_video(
        ve_p, padded["w1"], padded["b1"], padded["w2"], padded["b2"],
        padded["gamma"], padded["beta"], tm=tm, compute_dtype=compute_dtype,
    )                                                   # (depth, Mp, dim)
    # 3) ResMLP on the prompt rows (computed once per depth, not per batch).
    out_prm = resmlp_prompt(
        params["prompt"], padded["w1"], padded["b1"], padded["w2"],
        padded["b2"], padded["gamma"], padded["beta"],
        compute_dtype=compute_dtype,
    )                                                   # (depth, P, dim)

    out_vid = out_vid[:, :Mv, :].reshape(depth, bsz, T, dim)
    out_prm_b = jnp.broadcast_to(out_prm[:, None], (depth, bsz, P, dim))
    return [jnp.concatenate([out_prm_b[i], out_vid[i]], axis=1)
            for i in range(depth)]


# ---------------------------------------------------------------------------
# Pure-JAX reference (for correctness check)
# ---------------------------------------------------------------------------
def prompting_reference(vfeat, params, *, depth, use_mlp=True):
    bsz = vfeat.shape[0]
    ve = vfeat @ params["W_emb"] + params["b_emb"]
    P = params["prompt"].shape[1]
    outs = []
    for i in range(depth):
        p = jnp.broadcast_to(params["prompt"][i][None], (bsz, P, ve.shape[-1]))
        x = jnp.concatenate([p, ve], axis=1)
        if use_mlp:
            h = jax.nn.relu(x @ params["w1"][i] + params["b1"][i])
            y = h @ params["w2"][i] + params["b2"][i]
            mean = y.mean(-1, keepdims=True)
            var = ((y - mean) ** 2).mean(-1, keepdims=True)
            y_ln = (y - mean) / jnp.sqrt(var + 1e-5) * params["gamma"][i] \
                + params["beta"][i]
            x = x + y_ln
        outs.append(x)
    return outs


# ---------------------------------------------------------------------------
# Deterministic parameter init (synthetic; mimics module shapes)
# ---------------------------------------------------------------------------
def init_params(key, *, dim, prompt_length, depth, feat_in=1024):
    bn = dim // 2
    ks = jax.random.split(key, 8)

    def uniform(k, shape, fan_in):
        bound = 1.0 / np.sqrt(fan_in)
        return jax.random.uniform(k, shape, jnp.float32, -bound, bound)

    # xavier_uniform for soft prompts: fan_in=prompt_length, fan_out=dim
    xa = float(np.sqrt(6.0 / (prompt_length + dim)))
    return {
        "W_emb": uniform(ks[0], (feat_in, dim), feat_in),
        "b_emb": uniform(ks[1], (dim,), feat_in),
        "prompt": jax.random.uniform(
            ks[2], (depth, prompt_length, dim), jnp.float32, -xa, xa
        ),
        "w1": uniform(ks[3], (depth, dim, bn), dim),
        "b1": uniform(ks[4], (depth, bn), dim),
        "w2": uniform(ks[5], (depth, bn, dim), bn),
        "b2": uniform(ks[6], (depth, dim), bn),
        "gamma": jnp.ones((depth, dim), jnp.float32),
        "beta": jnp.zeros((depth, dim), jnp.float32),
    }


if __name__ == "__main__":
    # Small shapes consistent with the module
    bsz, T, feat_in = 2, 8, 1024
    dim, prompt_length, depth = 32, 8, 4

    key = jax.random.PRNGKey(0)
    kp, kx = jax.random.split(key)
    params = init_params(kp, dim=dim, prompt_length=prompt_length, depth=depth,
                         feat_in=feat_in)
    padded = prepare_padded_params(params)   # one-time lane-dense padding
    vfeat = jax.random.normal(kx, (bsz, T, feat_in), jnp.float32)

    outs = prompting_forward(vfeat, params, padded, depth=depth, use_mlp=True)
    outs = [jax.block_until_ready(o) for o in outs]

    refs = prompting_reference(vfeat, params, depth=depth, use_mlp=True)
    for o, r in zip(outs, refs):
        np.testing.assert_allclose(np.asarray(o), np.asarray(r),
                                   rtol=1e-4, atol=1e-4)

    print("KERNEL_OK")
</pallas_src>

<mosaic_0001>
module attributes {stable_mosaic.version = 11 : i64} {
  func.func @_embed_kernel(%arg0: i32, %arg1: memref<16x1024xf32, #tpu.memory_space<vmem>>, %arg2: memref<1024x32xf32, #tpu.memory_space<vmem>>, %arg3: memref<1x32xf32, #tpu.memory_space<vmem>>, %arg4: memref<16x32xf32, #tpu.memory_space<vmem>>) attributes {dimension_semantics = [#tpu.dimension_semantics<parallel>], iteration_bounds = array<i64: 1>, scalar_prefetch = 0 : i64, scratch_operands = 0 : i64, tpu.core_type = #tpu.core_type<tc>, window_params = [{transform_indices = @transform_0, window_bounds = array<i64: 16, 1024>}, {pipeline_mode = #tpu.pipeline_mode<synchronous>, transform_indices = @transform_1, window_bounds = array<i64: 1024, 32>}, {pipeline_mode = #tpu.pipeline_mode<synchronous>, transform_indices = @transform_2, window_bounds = array<i64: 1, 32>}, {transform_indices = @transform_3, window_bounds = array<i64: 16, 32>}]} {
    %c0 = arith.constant 0 : index
    %c0_0 = arith.constant 0 : index
    %0 = vector.load %arg1[%c0, %c0_0] : memref<16x1024xf32, #tpu.memory_space<vmem>>, vector<16x1024xf32>
    %c0_1 = arith.constant 0 : index
    %c0_2 = arith.constant 0 : index
    %1 = vector.load %arg2[%c0_1, %c0_2] : memref<1024x32xf32, #tpu.memory_space<vmem>>, vector<1024x32xf32>
    %cst = arith.constant dense<0.000000e+00> : vector<16x32xf32>
    %2 = tpu.matmul %0, %1, %cst {dimension_numbers = #tpu.dot_dimension_numbers<[1], [0], [0], [1], [0, 0, 1, 1], [], []>} : vector<16x1024xf32>, vector<1024x32xf32>, vector<16x32xf32> -> vector<16x32xf32>
    %c0_3 = arith.constant 0 : index
    %c0_4 = arith.constant 0 : index
    %3 = vector.load %arg3[%c0_3, %c0_4] : memref<1x32xf32, #tpu.memory_space<vmem>>, vector<1x32xf32>
    %4 = vector.broadcast %3 : vector<1x32xf32> to vector<16x32xf32>
    %5 = arith.addf %2, %4 : vector<16x32xf32>
    %c0_5 = arith.constant 0 : index
    %c0_6 = arith.constant 0 : index
    %6 = vector.load %arg4[%c0_5, %c0_6] : memref<16x32xf32, #tpu.memory_space<vmem>>, vector<16x32xf32>
    tpu.vector_store %arg4[%c0_5, %c0_6], %5 {strides = array<i32>} : memref<16x32xf32, #tpu.memory_space<vmem>>, vector<16x32xf32>,
    return
  }
  func.func @transform_0(%arg0: i32) -> (i32, i32) {
    %c0_i32 = arith.constant 0 : i32
    %c0_i32_0 = arith.constant 0 : i32
    return %arg0, %c0_i32 : i32, i32
  }
  func.func @transform_1(%arg0: i32) -> (i32, i32) {
    %c0_i32 = arith.constant 0 : i32
    %c0_i32_0 = arith.constant 0 : i32
    %c0_i32_1 = arith.constant 0 : i32
    return %c0_i32, %c0_i32_0 : i32, i32
  }
  func.func @transform_2(%arg0: i32) -> (i32, i32) {
    %c0_i32 = arith.constant 0 : i32
    %c0_i32_0 = arith.constant 0 : i32
    %c0_i32_1 = arith.constant 0 : i32
    return %c0_i32, %c0_i32_0 : i32, i32
  }
  func.func @transform_3(%arg0: i32) -> (i32, i32) {
    %c0_i32 = arith.constant 0 : i32
    %c0_i32_0 = arith.constant 0 : i32
    return %arg0, %c0_i32 : i32, i32
  }
}

</mosaic_0001>

<llo_original>
// kernel: tpu_custom_call.1
$region0: #{tpu_custom_call.1}
  #allocation0 [shape = 'u32[]', space=smem, size = 0x4, offset = 0x4, fixed_abs, tag = 'smem constant byte address 0x4 - core index']
  #allocation1 [shape = 'u32[72,128]{1,0:T(1,128)}', space=vmem, size = 0x9000, scoped, tag = 'internal scratch']
  %s0 = inlined_call_operand.vmem [shape: f32[16,1024], index: 0, kind: input, shape index: {}]
  %s1 = inlined_call_operand.vmem [shape: f32[1024,32], index: 1, kind: input, shape index: {}]
  %s2 = inlined_call_operand.vmem [shape: f32[1,32], index: 2, kind: input, shape index: {}]
  %s3 = inlined_call_operand.hbm [shape: f32[16,32], index: 3, kind: output, shape index: {}]
  %s4 = sld [smem:[#allocation0]]
  $region22: #{tpu_custom_call.1} parent=0
    _
  %s6 = ssub.s32 1, %s4
  %s7 = scalar_select 0, %s6, %s4
  $region1: #{tpu_custom_call.1} parent=0
    #allocation2 [shape = 'u8[8192]{0}', space=vmem, size = 0x2000, scoped, tag = 'output window, operand 0, single buffered']
    #allocation3 [shape = 's32[1]{0}', space=sflag, size = 0x4, scoped, tag = 'scoped memory for tpu_custom_call.1']
    %8 = vsyncpa [#allocation3], 0
    // Predicated region
    $region2: #{tpu_custom_call.1} parent=1 // pred_check
      _
    $region3: #{tpu_custom_call.1} parent=1 // pred_check_branch
      %10 = sbr.rel (0) target = $region5
    $region4: #{tpu_custom_call.1} parent=1 // pred_region
      _
    $region5: #{tpu_custom_call.1} parent=1 // pred_fallthru
      _
    // Predicated region
    $region6: #{tpu_custom_call.1} parent=1 // pred_check
      _
    $region7: #{tpu_custom_call.1} parent=1 // pred_check_branch
      %12 = sbr.rel (0) target = $region9
    $region8: #{tpu_custom_call.1} parent=1 // pred_region
      _
    $region9: #{tpu_custom_call.1} parent=1 // pred_fallthru
      _
    // Predicated region
    $region10: #{tpu_custom_call.1} parent=1 // pred_check
      _
    $region11: #{tpu_custom_call.1} parent=1 // pred_check_branch
      %14 = sbr.rel (0) target = $region13
    $region12: #{tpu_custom_call.1} parent=1 // pred_region
      _
    $region13: #{tpu_custom_call.1} parent=1 // pred_fallthru
      _
    %v15 = vld [vmem:[%s0] sm:$0xff]
    %v16 = vld [vmem:[%s0 + $0x8] sm:$0xff]
    %v17 = vld [vmem:[%s0 + $0x10] sm:$0xff]
    %v18 = vld [vmem:[%s0 + $0x18] sm:$0xff]
    %v19 = vld [vmem:[%s0 + $0x20] sm:$0xff]
    %v20 = vld [vmem:[%s0 + $0x28] sm:$0xff]
    %v21 = vld [vmem:[%s0 + $0x30] sm:$0xff]
    %v22 = vld [vmem:[%s0 + $0x38] sm:$0xff]
    %v23 = vld [vmem:[%s0 + $0x40] sm:$0xff]
    %v24 = vld [vmem:[%s0 + $0x48] sm:$0xff]
    %v25 = vld [vmem:[%s0 + $0x50] sm:$0xff]
    %v26 = vld [vmem:[%s0 + $0x58] sm:$0xff]
    %v27 = vld [vmem:[%s0 + $0x60] sm:$0xff]
    %v28 = vld [vmem:[%s0 + $0x68] sm:$0xff]
    %v29 = vld [vmem:[%s0 + $0x70] sm:$0xff]
    %v30 = vld [vmem:[%s0 + $0x78] sm:$0xff]
    %v31 = vld [vmem:[%s1] sm:$0xff]
    %v32 = vld [vmem:[%s1 + $0x8] sm:$0xff]
    %v33 = vld [vmem:[%s1 + $0x10] sm:$0xff]
    %v34 = vld [vmem:[%s1 + $0x18] sm:$0xff]
    %v35 = vld [vmem:[%s1 + $0x20] sm:$0xff]
    %v36 = vld [vmem:[%s1 + $0x28] sm:$0xff]
    %v37 = vld [vmem:[%s1 + $0x30] sm:$0xff]
    %v38 = vld [vmem:[%s1 + $0x38] sm:$0xff]
    %v39 = vld [vmem:[%s1 + $0x40] sm:$0xff]
    %v40 = vld [vmem:[%s1 + $0x48] sm:$0xff]
    %v41 = vld [vmem:[%s1 + $0x50] sm:$0xff]
    %v42 = vld [vmem:[%s1 + $0x58] sm:$0xff]
    %v43 = vld [vmem:[%s1 + $0x60] sm:$0xff]
    %v44 = vld [vmem:[%s1 + $0x68] sm:$0xff]
    %v45 = vld [vmem:[%s1 + $0x70] sm:$0xff]
    %v46 = vld [vmem:[%s1 + $0x78] sm:$0xff]
    %v47 = vld [vmem:[%s1 + $0x80] sm:$0xff]
    %v48 = vld [vmem:[%s1 + $0x88] sm:$0xff]
    %v49 = vld [vmem:[%s1 + $0x90] sm:$0xff]
    %v50 = vld [vmem:[%s1 + $0x98] sm:$0xff]
    %v51 = vld [vmem:[%s1 + $0xa0] sm:$0xff]
    %v52 = vld [vmem:[%s1 + $0xa8] sm:$0xff]
    %v53 = vld [vmem:[%s1 + $0xb0] sm:$0xff]
    %v54 = vld [vmem:[%s1 + $0xb8] sm:$0xff]
    %v55 = vld [vmem:[%s1 + $0xc0] sm:$0xff]
    %v56 = vld [vmem:[%s1 + $0xc8] sm:$0xff]
    %v57 = vld [vmem:[%s1 + $0xd0] sm:$0xff]
    %v58 = vld [vmem:[%s1 + $0xd8] sm:$0xff]
    %v59 = vld [vmem:[%s1 + $0xe0] sm:$0xff]
    %v60 = vld [vmem:[%s1 + $0xe8] sm:$0xff]
    %v61 = vld [vmem:[%s1 + $0xf0] sm:$0xff]
    %v62 = vld [vmem:[%s1 + $0xf8] sm:$0xff]
    %v63 = vld [vmem:[%s1 + $0x100] sm:$0xff]
    %v64 = vld [vmem:[%s1 + $0x108] sm:$0xff]
    %v65 = vld [vmem:[%s1 + $0x110] sm:$0xff]
    %v66 = vld [vmem:[%s1 + $0x118] sm:$0xff]
    %v67 = vld [vmem:[%s1 + $0x120] sm:$0xff]
    %v68 = vld [vmem:[%s1 + $0x128] sm:$0xff]
    %v69 = vld [vmem:[%s1 + $0x130] sm:$0xff]
    %v70 = vld [vmem:[%s1 + $0x138] sm:$0xff]
    %v71 = vld [vmem:[%s1 + $0x140] sm:$0xff]
    %v72 = vld [vmem:[%s1 + $0x148] sm:$0xff]
    %v73 = vld [vmem:[%s1 + $0x150] sm:$0xff]
    %v74 = vld [vmem:[%s1 + $0x158] sm:$0xff]
    %v75 = vld [vmem:[%s1 + $0x160] sm:$0xff]
    %v76 = vld [vmem:[%s1 + $0x168] sm:$0xff]
    %v77 = vld [vmem:[%s1 + $0x170] sm:$0xff]
    %v78 = vld [vmem:[%s1 + $0x178] sm:$0xff]
    %v79 = vld [vmem:[%s1 + $0x180] sm:$0xff]
    %v80 = vld [vmem:[%s1 + $0x188] sm:$0xff]
    %v81 = vld [vmem:[%s1 + $0x190] sm:$0xff]
    %v82 = vld [vmem:[%s1 + $0x198] sm:$0xff]
    %v83 = vld [vmem:[%s1 + $0x1a0] sm:$0xff]
    %v84 = vld [vmem:[%s1 + $0x1a8] sm:$0xff]
    %v85 = vld [vmem:[%s1 + $0x1b0] sm:$0xff]
    %v86 = vld [vmem:[%s1 + $0x1b8] sm:$0xff]
    %v87 = vld [vmem:[%s1 + $0x1c0] sm:$0xff]
    %v88 = vld [vmem:[%s1 + $0x1c8] sm:$0xff]
    %v89 = vld [vmem:[%s1 + $0x1d0] sm:$0xff]
    %v90 = vld [vmem:[%s1 + $0x1d8] sm:$0xff]
    %v91 = vld [vmem:[%s1 + $0x1e0] sm:$0xff]
    %v92 = vld [vmem:[%s1 + $0x1e8] sm:$0xff]
    %v93 = vld [vmem:[%s1 + $0x1f0] sm:$0xff]
    %v94 = vld [vmem:[%s1 + $0x1f8] sm:$0xff]
    %v95 = vld [vmem:[%s1 + $0x200] sm:$0xff]
    %v96 = vld [vmem:[%s1 + $0x208] sm:$0xff]
    %v97 = vld [vmem:[%s1 + $0x210] sm:$0xff]
    %v98 = vld [vmem:[%s1 + $0x218] sm:$0xff]
    %v99 = vld [vmem:[%s1 + $0x220] sm:$0xff]
    %v100 = vld [vmem:[%s1 + $0x228] sm:$0xff]
    %v101 = vld [vmem:[%s1 + $0x230] sm:$0xff]
    %v102 = vld [vmem:[%s1 + $0x238] sm:$0xff]
    %v103 = vld [vmem:[%s1 + $0x240] sm:$0xff]
    %v104 = vld [vmem:[%s1 + $0x248] sm:$0xff]
    %v105 = vld [vmem:[%s1 + $0x250] sm:$0xff]
    %v106 = vld [vmem:[%s1 + $0x258] sm:$0xff]
    %v107 = vld [vmem:[%s1 + $0x260] sm:$0xff]
    %v108 = vld [vmem:[%s1 + $0x268] sm:$0xff]
    %v109 = vld [vmem:[%s1 + $0x270] sm:$0xff]
    %v110 = vld [vmem:[%s1 + $0x278] sm:$0xff]
    %v111 = vld [vmem:[%s1 + $0x280] sm:$0xff]
    %v112 = vld [vmem:[%s1 + $0x288] sm:$0xff]
    %v113 = vld [vmem:[%s1 + $0x290] sm:$0xff]
    %v114 = vld [vmem:[%s1 + $0x298] sm:$0xff]
    %v115 = vld [vmem:[%s1 + $0x2a0] sm:$0xff]
    %v116 = vld [vmem:[%s1 + $0x2a8] sm:$0xff]
    %v117 = vld [vmem:[%s1 + $0x2b0] sm:$0xff]
    %v118 = vld [vmem:[%s1 + $0x2b8] sm:$0xff]
    %v119 = vld [vmem:[%s1 + $0x2c0] sm:$0xff]
    %v120 = vld [vmem:[%s1 + $0x2c8] sm:$0xff]
    %v121 = vld [vmem:[%s1 + $0x2d0] sm:$0xff]
    %v122 = vld [vmem:[%s1 + $0x2d8] sm:$0xff]
    %v123 = vld [vmem:[%s1 + $0x2e0] sm:$0xff]
    %v124 = vld [vmem:[%s1 + $0x2e8] sm:$0xff]
    %v125 = vld [vmem:[%s1 + $0x2f0] sm:$0xff]
    %v126 = vld [vmem:[%s1 + $0x2f8] sm:$0xff]
    %v127 = vld [vmem:[%s1 + $0x300] sm:$0xff]
    %v128 = vld [vmem:[%s1 + $0x308] sm:$0xff]
    %v129 = vld [vmem:[%s1 + $0x310] sm:$0xff]
    %v130 = vld [vmem:[%s1 + $0x318] sm:$0xff]
    %v131 = vld [vmem:[%s1 + $0x320] sm:$0xff]
    %v132 = vld [vmem:[%s1 + $0x328] sm:$0xff]
    %v133 = vld [vmem:[%s1 + $0x330] sm:$0xff]
    %v134 = vld [vmem:[%s1 + $0x338] sm:$0xff]
    %v135 = vld [vmem:[%s1 + $0x340] sm:$0xff]
    %v136 = vld [vmem:[%s1 + $0x348] sm:$0xff]
    %v137 = vld [vmem:[%s1 + $0x350] sm:$0xff]
    %v138 = vld [vmem:[%s1 + $0x358] sm:$0xff]
    %v139 = vld [vmem:[%s1 + $0x360] sm:$0xff]
    %v140 = vld [vmem:[%s1 + $0x368] sm:$0xff]
    %v141 = vld [vmem:[%s1 + $0x370] sm:$0xff]
    %v142 = vld [vmem:[%s1 + $0x378] sm:$0xff]
    %v143 = vld [vmem:[%s1 + $0x380] sm:$0xff]
    %v144 = vld [vmem:[%s1 + $0x388] sm:$0xff]
    %v145 = vld [vmem:[%s1 + $0x390] sm:$0xff]
    %v146 = vld [vmem:[%s1 + $0x398] sm:$0xff]
    %v147 = vld [vmem:[%s1 + $0x3a0] sm:$0xff]
    %v148 = vld [vmem:[%s1 + $0x3a8] sm:$0xff]
    %v149 = vld [vmem:[%s1 + $0x3b0] sm:$0xff]
    %v150 = vld [vmem:[%s1 + $0x3b8] sm:$0xff]
    %v151 = vld [vmem:[%s1 + $0x3c0] sm:$0xff]
    %v152 = vld [vmem:[%s1 + $0x3c8] sm:$0xff]
    %v153 = vld [vmem:[%s1 + $0x3d0] sm:$0xff]
    %v154 = vld [vmem:[%s1 + $0x3d8] sm:$0xff]
    %v155 = vld [vmem:[%s1 + $0x3e0] sm:$0xff]
    %v156 = vld [vmem:[%s1 + $0x3e8] sm:$0xff]
    %v157 = vld [vmem:[%s1 + $0x3f0] sm:$0xff]
    %v158 = vld [vmem:[%s1 + $0x3f8] sm:$0xff]
    %v159 = vld [vmem:[%s2] sm:$0x1]
    %v161 = vperm.slane %v159, 0
    %163 = vmatpush.msra.mxu0 %v46
    %164 = vmatpush.msra.mxu0 %v45
    %165 = vmatpush.msra.mxu0 %v44
    %166 = vmatpush.msra.mxu0 %v43
    %167 = vmatpush.msra.mxu0 %v42
    %168 = vmatpush.msra.mxu0 %v41
    %169 = vmatpush.msra.mxu0 %v40
    %170 = vmatpush.msra.mxu0 %v39
    %171 = vmatpush.msra.mxu0 %v38
    %172 = vmatpush.msra.mxu0 %v37
    %173 = vmatpush.msra.mxu0 %v36
    %174 = vmatpush.msra.mxu0 %v35
    %175 = vmatpush.msra.mxu0 %v34
    %176 = vmatpush.msra.mxu0 %v33
    %177 = vmatpush.msra.mxu0 %v32
    %178 = vmatpush.msra.mxu0 %v31
    %179 = vmatmul.f32.gmra.mxu0 %v15
    %v180 = vpop.f32.mrf.mxu0
    %v181 = vadd.f32 %v161, %v180
    %182 = vmatmul.f32.gmra.mxu0 %v23
    %v183 = vpop.f32.mrf.mxu0
    %v184 = vadd.f32 %v161, %v183
    %185 = vdwg.mxu0
    %186 = vmatpush.msra.mxu0 %v62
    %187 = vmatpush.msra.mxu0 %v61
    %188 = vmatpush.msra.mxu0 %v60
    %189 = vmatpush.msra.mxu0 %v59
    %190 = vmatpush.msra.mxu0 %v58
    %191 = vmatpush.msra.mxu0 %v57
    %192 = vmatpush.msra.mxu0 %v56
    %193 = vmatpush.msra.mxu0 %v55
    %194 = vmatpush.msra.mxu0 %v54
    %195 = vmatpush.msra.mxu0 %v53
    %196 = vmatpush.msra.mxu0 %v52
    %197 = vmatpush.msra.mxu0 %v51
    %198 = vmatpush.msra.mxu0 %v50
    %199 = vmatpush.msra.mxu0 %v49
    %200 = vmatpush.msra.mxu0 %v48
    %201 = vmatpush.msra.mxu0 %v47
    %202 = vmatmul.f32.gmra.mxu0 %v16
    %v203 = vpop.f32.mrf.mxu0
    %v204 = vadd.f32 %v181, %v203
    %205 = vmatmul.f32.gmra.mxu0 %v24
    %v206 = vpop.f32.mrf.mxu0
    %v207 = vadd.f32 %v184, %v206
    %208 = vdwg.mxu0
    %209 = vmatpush.msra.mxu0 %v78
    %210 = vmatpush.msra.mxu0 %v77
    %211 = vmatpush.msra.mxu0 %v76
    %212 = vmatpush.msra.mxu0 %v75
    %213 = vmatpush.msra.mxu0 %v74
    %214 = vmatpush.msra.mxu0 %v73
    %215 = vmatpush.msra.mxu0 %v72
    %216 = vmatpush.msra.mxu0 %v71
    %217 = vmatpush.msra.mxu0 %v70
    %218 = vmatpush.msra.mxu0 %v69
    %219 = vmatpush.msra.mxu0 %v68
    %220 = vmatpush.msra.mxu0 %v67
    %221 = vmatpush.msra.mxu0 %v66
    %222 = vmatpush.msra.mxu0 %v65
    %223 = vmatpush.msra.mxu0 %v64
    %224 = vmatpush.msra.mxu0 %v63
    %225 = vmatmul.f32.gmra.mxu0 %v17
    %v226 = vpop.f32.mrf.mxu0
    %v227 = vadd.f32 %v204, %v226
    %228 = vmatmul.f32.gmra.mxu0 %v25
    %v229 = vpop.f32.mrf.mxu0
    %v230 = vadd.f32 %v207, %v229
    %231 = vdwg.mxu0
    %232 = vmatpush.msra.mxu0 %v94
    %233 = vmatpush.msra.mxu0 %v93
    %234 = vmatpush.msra.mxu0 %v92
    %235 = vmatpush.msra.mxu0 %v91
    %236 = vmatpush.msra.mxu0 %v90
    %237 = vmatpush.msra.mxu0 %v89
    %238 = vmatpush.msra.mxu0 %v88
    %239 = vmatpush.msra.mxu0 %v87
    %240 = vmatpush.msra.mxu0 %v86
    %241 = vmatpush.msra.mxu0 %v85
    %242 = vmatpush.msra.mxu0 %v84
    %243 = vmatpush.msra.mxu0 %v83
    %244 = vmatpush.msra.mxu0 %v82
    %245 = vmatpush.msra.mxu0 %v81
    %246 = vmatpush.msra.mxu0 %v80
    %247 = vmatpush.msra.mxu0 %v79
    %248 = vmatmul.f32.gmra.mxu0 %v18
    %v249 = vpop.f32.mrf.mxu0
    %v250 = vadd.f32 %v227, %v249
    %251 = vmatmul.f32.gmra.mxu0 %v26
    %v252 = vpop.f32.mrf.mxu0
    %v253 = vadd.f32 %v230, %v252
    %254 = vdwg.mxu0
    %255 = vmatpush.msra.mxu0 %v110
    %256 = vmatpush.msra.mxu0 %v109
    %257 = vmatpush.msra.mxu0 %v108
    %258 = vmatpush.msra.mxu0 %v107
    %259 = vmatpush.msra.mxu0 %v106
    %260 = vmatpush.msra.mxu0 %v105
    %261 = vmatpush.msra.mxu0 %v104
    %262 = vmatpush.msra.mxu0 %v103
    %263 = vmatpush.msra.mxu0 %v102
    %264 = vmatpush.msra.mxu0 %v101
    %265 = vmatpush.msra.mxu0 %v100
    %266 = vmatpush.msra.mxu0 %v99
    %267 = vmatpush.msra.mxu0 %v98
    %268 = vmatpush.msra.mxu0 %v97
    %269 = vmatpush.msra.mxu0 %v96
    %270 = vmatpush.msra.mxu0 %v95
    %271 = vmatmul.f32.gmra.mxu0 %v19
    %v272 = vpop.f32.mrf.mxu0
    %v273 = vadd.f32 %v250, %v272
    %274 = vmatmul.f32.gmra.mxu0 %v27
    %v275 = vpop.f32.mrf.mxu0
    %v276 = vadd.f32 %v253, %v275
    %277 = vdwg.mxu0
    %278 = vmatpush.msra.mxu0 %v126
    %279 = vmatpush.msra.mxu0 %v125
    %280 = vmatpush.msra.mxu0 %v124
    %281 = vmatpush.msra.mxu0 %v123
    %282 = vmatpush.msra.mxu0 %v122
    %283 = vmatpush.msra.mxu0 %v121
    %284 = vmatpush.msra.mxu0 %v120
    %285 = vmatpush.msra.mxu0 %v119
    %286 = vmatpush.msra.mxu0 %v118
    %287 = vmatpush.msra.mxu0 %v117
    %288 = vmatpush.msra.mxu0 %v116
    %289 = vmatpush.msra.mxu0 %v115
    %290 = vmatpush.msra.mxu0 %v114
    %291 = vmatpush.msra.mxu0 %v113
    %292 = vmatpush.msra.mxu0 %v112
    %293 = vmatpush.msra.mxu0 %v111
    %294 = vmatmul.f32.gmra.mxu0 %v20
    %v295 = vpop.f32.mrf.mxu0
    %v296 = vadd.f32 %v273, %v295
    %297 = vmatmul.f32.gmra.mxu0 %v28
    %v298 = vpop.f32.mrf.mxu0
    %v299 = vadd.f32 %v276, %v298
    %300 = vdwg.mxu0
    %301 = vmatpush.msra.mxu0 %v142
    %302 = vmatpush.msra.mxu0 %v141
    %303 = vmatpush.msra.mxu0 %v140
    %304 = vmatpush.msra.mxu0 %v139
    %305 = vmatpush.msra.mxu0 %v138
    %306 = vmatpush.msra.mxu0 %v137
    %307 = vmatpush.msra.mxu0 %v136
    %308 = vmatpush.msra.mxu0 %v135
    %309 = vmatpush.msra.mxu0 %v134
    %310 = vmatpush.msra.mxu0 %v133
    %311 = vmatpush.msra.mxu0 %v132
    %312 = vmatpush.msra.mxu0 %v131
    %313 = vmatpush.msra.mxu0 %v130
    %314 = vmatpush.msra.mxu0 %v129
    %315 = vmatpush.msra.mxu0 %v128
    %316 = vmatpush.msra.mxu0 %v127
    %317 = vmatmul.f32.gmra.mxu0 %v21
    %v318 = vpop.f32.mrf.mxu0
    %v319 = vadd.f32 %v296, %v318
    %320 = vmatmul.f32.gmra.mxu0 %v29
    %v321 = vpop.f32.mrf.mxu0
    %v322 = vadd.f32 %v299, %v321
    %323 = vdwg.mxu0
    %324 = vmatpush.msra.mxu0 %v158
    %325 = vmatpush.msra.mxu0 %v157
    %326 = vmatpush.msra.mxu0 %v156
    %327 = vmatpush.msra.mxu0 %v155
    %328 = vmatpush.msra.mxu0 %v154
    %329 = vmatpush.msra.mxu0 %v153
    %330 = vmatpush.msra.mxu0 %v152
    %331 = vmatpush.msra.mxu0 %v151
    %332 = vmatpush.msra.mxu0 %v150
    %333 = vmatpush.msra.mxu0 %v149
    %334 = vmatpush.msra.mxu0 %v148
    %335 = vmatpush.msra.mxu0 %v147
    %336 = vmatpush.msra.mxu0 %v146
    %337 = vmatpush.msra.mxu0 %v145
    %338 = vmatpush.msra.mxu0 %v144
    %339 = vmatpush.msra.mxu0 %v143
    %340 = vmatmul.f32.gmra.mxu0 %v22
    %v341 = vpop.f32.mrf.mxu0
    %v342 = vadd.f32 %v319, %v341
    %343 = vmatmul.f32.gmra.mxu0 %v30
    %v344 = vpop.f32.mrf.mxu0
    %v345 = vadd.f32 %v322, %v344
    %346 = vdwg.mxu0
    %vm347 = vcmask 261120
    %348 = vst.msk [vmem:[#allocation2] sm:$0xff] %vm347, %v342
    %349 = vst.msk [vmem:[#allocation2 + $0x8] sm:$0xff] %vm347, %v345
    // Predicated region
    $region14: #{tpu_custom_call.1} parent=1 // pred_check
      _
    $region15: #{tpu_custom_call.1} parent=1 // pred_check_branch
      %351 = sbr.rel (0) target = $region17
    $region16: #{tpu_custom_call.1} parent=1 // pred_region
      %353 = vsyncadd [#allocation3], 0
      %s354 = sshll.u32 [#allocation2], 4
      %s355 = int_to_ptr.vmem [resolvable:$true] %s354
      %s356 = sshll.u32 %s3, 4
      %s357 = int_to_ptr.hbm [resolvable:$true] %s356
      %362 = dma.vmem_to_hbm [thread:$0]  %s355, 256, %s357, [#allocation3], 128, 128, 8
    $region17: #{tpu_custom_call.1} parent=1 // pred_fallthru
      _
    // Predicated region
    $region18: #{tpu_custom_call.1} parent=1 // pred_check
      _
    $region19: #{tpu_custom_call.1} parent=1 // pred_check_branch
      %364 = sbr.rel (0) target = $region21
    $region20: #{tpu_custom_call.1} parent=1 // pred_region
      %366 = dma.done [#allocation3], 256
    $region21: #{tpu_custom_call.1} parent=1 // pred_fallthru
      _
    %367 = vsyncpa [#allocation3], 1

</llo_original>
